<compile_context>
chip_gen: v5e
topology: v5e:2x2
jax: 0.10.0
libtpu: 0.0.40
codegen_flags: <defaults>
</compile_context>

<pallas_src>
import functools

import jax
import jax.numpy as jnp
from jax.experimental import pallas as pl
from jax.experimental.pallas import tpu as pltpu


_STATIC_UNROLL_MAX = 128  # fully unroll per-slab issue/drain loops up to this many rows


def _pick_batch_block(B: int, batch_block: int) -> int:
    """Batch elements per grid step: amortize per-step cost, but keep >= 2 grid steps
    whenever B > 1 so both v7x TensorCores can split the (parallel) batch axis."""
    Bb = max(1, min(batch_block, B))
    while Bb > 1 and pl.cdiv(B, Bb) < 2:
        Bb = max(1, Bb // 2)
    return Bb


def clip_embedding(x, token_embedding, position_embedding, *, batch_block=8):
    """x: (B, T) int token ids -> (B, T, D) = token_embedding[x] + position_embedding."""
    B, T = x.shape
    V, D = token_embedding.shape
    assert position_embedding.shape == (T, D)
    out_dtype = token_embedding.dtype

    Bb = _pick_batch_block(B, batch_block)
    n_blocks = pl.cdiv(B, Bb)
    B_pad = n_blocks * Bb

    def kernel(ids_ref, tok_hbm, pos_ref, o_ref, gbuf, sems):
        # ids_ref : (B_pad*T,) int32 in SMEM (scalar prefetch)
        # tok_hbm : (V, D) embedding table, left in HBM (pl.ANY)
        # pos_ref : (T, D) position embedding, VMEM-resident for the whole call
        # o_ref   : (Bb, T, D) output block for this batch super-block
        # gbuf    : (Bb, T, D) VMEM landing buffer for the gathered rows
        # sems    : (Bb,) DMA semaphores, one per batch element of the super-block
        g = pl.program_id(0)
        base = g * (Bb * T)

        def row_copy(src_row, bb, t):
            # The drain rebuilds this exact descriptor (same (1, D) shape, same
            # semaphore), so start/wait amounts stay congruent by construction.
            return pltpu.make_async_copy(
                tok_hbm.at[pl.ds(src_row, 1)],
                gbuf.at[bb, pl.ds(t, 1)],
                sems.at[bb])

        def issue(bb, t):
            idx = ids_ref[base + bb * T + t]  # SMEM scalar read, before any .wait()
            row_copy(idx, bb, t).start()

        def drain(bb, t):
            row_copy(0, bb, t).wait()

        # Phase 1: issue ALL Bb*T row gathers back-to-back — no in-flight throttle.
        for bb in range(Bb):
            if T <= _STATIC_UNROLL_MAX:
                for t in range(T):
                    issue(bb, t)
            else:
                pl.loop(0, T)(functools.partial(issue, bb))

        # Phase 2: per batch element, wait for its T rows (its private semaphore only
        # receives signals from its own rows), then add + store its (T, D) tile while
        # the remaining slabs' DMAs are still in flight.
        for bb in range(Bb):
            if T <= _STATIC_UNROLL_MAX:
                for t in range(T):
                    drain(bb, t)
            else:
                pl.loop(0, T)(functools.partial(drain, bb))
            o_ref[bb] = (gbuf[bb] + pos_ref[...]).astype(o_ref.dtype)

    grid_spec = pltpu.PrefetchScalarGridSpec(
        num_scalar_prefetch=1,                              # token ids -> SMEM
        grid=(n_blocks,),
        in_specs=[
            pl.BlockSpec(memory_space=pl.ANY),              # token table: raw HBM ref
            pl.BlockSpec((T, D), lambda g, ids: (0, 0)),    # pos emb: VMEM-resident
        ],
        out_specs=pl.BlockSpec((Bb, T, D), lambda g, ids: (g, 0, 0)),
        scratch_shapes=[
            pltpu.VMEM((Bb, T, D), token_embedding.dtype),
            pltpu.SemaphoreType.DMA((Bb,)),
        ],
    )

    tok_isz = jnp.dtype(token_embedding.dtype).itemsize
    pos_isz = jnp.dtype(position_embedding.dtype).itemsize
    out_isz = jnp.dtype(out_dtype).itemsize

    cost = pl.CostEstimate(
        flops=B_pad * T * D,                                # the position add
        transcendentals=0,
        bytes_accessed=(B_pad * T * 4                       # token ids
                        + B_pad * T * D * tok_isz           # gathered table rows
                        + T * D * pos_isz                   # position table (once)
                        + B_pad * T * D * out_isz))         # output

    # Conservative VMEM footprint (tile-padded) + headroom; keeps the scoped limit sane
    # on all generations (v5e default 16 MiB, v6e/v7x 32 MiB).
    Tp = -(-T // 8) * 8
    Dp = -(-D // 128) * 128
    vmem_needed = (Bb * Tp * Dp * tok_isz                   # gbuf
                   + 2 * Tp * Dp * pos_isz                  # pos block (+ slack)
                   + 2 * Bb * Tp * Dp * out_isz)            # double-buffered out block
    vmem_limit = int(min(max(2 * vmem_needed, 16 * 2 ** 20), 100 * 2 ** 20))

    ids = jnp.clip(x.astype(jnp.int32), 0, V - 1).reshape(-1)
    if B_pad != B:
        ids = jnp.pad(ids, (0, (B_pad - B) * T))            # padded batches gather row 0

    out = pl.pallas_call(
        kernel,
        out_shape=jax.ShapeDtypeStruct((B_pad, T, D), out_dtype),
        grid_spec=grid_spec,
        compiler_params=pltpu.CompilerParams(
            dimension_semantics=("parallel",),
            vmem_limit_bytes=vmem_limit),
        cost_estimate=cost,
    )(ids, token_embedding, position_embedding)

    return out[:B] if B_pad != B else out


if __name__ == "__main__":
    # Small shapes consistent with CLIPEmbedding(n_vocab, n_embd, n_tokens)
    n_vocab, n_embd, n_tokens = 64, 128, 8
    batch = 2

    key = jax.random.PRNGKey(0)
    k_ids, k_tok, k_pos = jax.random.split(key, 3)

    # Deterministic synthetic parameters (shapes follow the module __init__).
    token_embedding = jax.random.normal(k_tok, (n_vocab, n_embd), jnp.float32)
    position_embedding = 0.01 * jax.random.normal(
        k_pos, (n_tokens, n_embd), jnp.float32)

    x = jax.random.randint(k_ids, (batch, n_tokens), 0, n_vocab, jnp.int32)

    out = clip_embedding(x, token_embedding, position_embedding)
    out = jax.block_until_ready(out)

    # Reference (plain JAX) check of the forward semantics.
    ref = jnp.take(token_embedding, x, axis=0) + position_embedding[None]
    assert out.shape == (batch, n_tokens, n_embd)
    assert out.dtype == jnp.float32
    assert jnp.allclose(out, ref, atol=1e-6), "mismatch vs reference"

    print("KERNEL_OK")
</pallas_src>

<mosaic_0001>
module attributes {stable_mosaic.version = 11 : i64} {
  func.func @kernel(%arg0: i32, %arg1: memref<16xi32, #tpu.memory_space<smem>>, %arg2: memref<64x128xf32, #tpu.memory_space<any>>, %arg3: memref<8x128xf32, #tpu.memory_space<vmem>>, %arg4: memref<1x8x128xf32, #tpu.memory_space<vmem>>, %arg5: memref<1x8x128xf32, #tpu.memory_space<vmem>>, %arg6: memref<1x!tpu.dma_semaphore, #tpu.memory_space<semaphore_mem>>) attributes {dimension_semantics = [#tpu.dimension_semantics<parallel>], iteration_bounds = array<i64: 2>, scalar_prefetch = 1 : i64, scratch_operands = 2 : i64, tpu.core_type = #tpu.core_type<tc>, window_params = [{}, {pipeline_mode = #tpu.pipeline_mode<synchronous>, transform_indices = @transform_1, window_bounds = array<i64: 8, 128>}, {transform_indices = @transform_2, window_bounds = array<i64: 1, 8, 128>}]} {
    %c8_i32 = arith.constant 8 : i32
    %0 = arith.muli %arg0, %c8_i32 : i32
    %c0_i32 = arith.constant 0 : i32
    %1 = arith.addi %0, %c0_i32 : i32
    %c0_i32_0 = arith.constant 0 : i32
    %2 = arith.addi %1, %c0_i32_0 : i32
    %3 = arith.index_cast %2 : i32 to index
    %4 = memref.load %arg1[%3] : memref<16xi32, #tpu.memory_space<smem>>
    %c0_i32_1 = arith.constant 0 : i32
    %c0_i32_2 = arith.constant 0 : i32
    %c0_i32_3 = arith.constant 0 : i32
    %5 = tpu.memref_slice %arg2[%4, %c0_i32_3] : memref<64x128xf32, #tpu.memory_space<any>> -> memref<1x128xf32, #tpu.memory_space<any>>
    %c0_i32_4 = arith.constant 0 : i32
    %c0_i32_5 = arith.constant 0 : i32
    %6 = tpu.memref_slice %arg5[%c0_i32_1, %c0_i32_4, %c0_i32_5] : memref<1x8x128xf32, #tpu.memory_space<vmem>> -> memref<1x1x128xf32, #tpu.memory_space<vmem>>
    %7 = tpu.memref_squeeze %6 : memref<1x1x128xf32, #tpu.memory_space<vmem>> -> memref<1x128xf32, #tpu.memory_space<vmem>>
    %8 = tpu.memref_slice %arg6[%c0_i32_2] : memref<1x!tpu.dma_semaphore, #tpu.memory_space<semaphore_mem>> -> memref<1x!tpu.dma_semaphore, #tpu.memory_space<semaphore_mem>>
    %9 = tpu.memref_squeeze %8 : memref<1x!tpu.dma_semaphore, #tpu.memory_space<semaphore_mem>> -> memref<!tpu.dma_semaphore, #tpu.memory_space<semaphore_mem>>
    tpu.enqueue_dma source(%5 : memref<1x128xf32, #tpu.memory_space<any>>) target(%7 : memref<1x128xf32, #tpu.memory_space<vmem>>) target_semaphore(%9 : memref<!tpu.dma_semaphore, #tpu.memory_space<semaphore_mem>>)
    %c0_i32_6 = arith.constant 0 : i32
    %10 = arith.addi %0, %c0_i32_6 : i32
    %c1_i32 = arith.constant 1 : i32
    %11 = arith.addi %10, %c1_i32 : i32
    %12 = arith.index_cast %11 : i32 to index
    %13 = memref.load %arg1[%12] : memref<16xi32, #tpu.memory_space<smem>>
    %c0_i32_7 = arith.constant 0 : i32
    %c0_i32_8 = arith.constant 0 : i32
    %c0_i32_9 = arith.constant 0 : i32
    %14 = tpu.memref_slice %arg2[%13, %c0_i32_9] : memref<64x128xf32, #tpu.memory_space<any>> -> memref<1x128xf32, #tpu.memory_space<any>>
    %c1_i32_10 = arith.constant 1 : i32
    %c0_i32_11 = arith.constant 0 : i32
    %15 = tpu.memref_slice %arg5[%c0_i32_7, %c1_i32_10, %c0_i32_11] : memref<1x8x128xf32, #tpu.memory_space<vmem>> -> memref<1x1x128xf32, #tpu.memory_space<vmem>>
    %16 = tpu.memref_squeeze %15 : memref<1x1x128xf32, #tpu.memory_space<vmem>> -> memref<1x128xf32, #tpu.memory_space<vmem>>
    %17 = tpu.memref_slice %arg6[%c0_i32_8] : memref<1x!tpu.dma_semaphore, #tpu.memory_space<semaphore_mem>> -> memref<1x!tpu.dma_semaphore, #tpu.memory_space<semaphore_mem>>
    %18 = tpu.memref_squeeze %17 : memref<1x!tpu.dma_semaphore, #tpu.memory_space<semaphore_mem>> -> memref<!tpu.dma_semaphore, #tpu.memory_space<semaphore_mem>>
    tpu.enqueue_dma source(%14 : memref<1x128xf32, #tpu.memory_space<any>>) target(%16 : memref<1x128xf32, #tpu.memory_space<vmem>>) target_semaphore(%18 : memref<!tpu.dma_semaphore, #tpu.memory_space<semaphore_mem>>)
    %c0_i32_12 = arith.constant 0 : i32
    %19 = arith.addi %0, %c0_i32_12 : i32
    %c2_i32 = arith.constant 2 : i32
    %20 = arith.addi %19, %c2_i32 : i32
    %21 = arith.index_cast %20 : i32 to index
    %22 = memref.load %arg1[%21] : memref<16xi32, #tpu.memory_space<smem>>
    %c0_i32_13 = arith.constant 0 : i32
    %c0_i32_14 = arith.constant 0 : i32
    %c0_i32_15 = arith.constant 0 : i32
    %23 = tpu.memref_slice %arg2[%22, %c0_i32_15] : memref<64x128xf32, #tpu.memory_space<any>> -> memref<1x128xf32, #tpu.memory_space<any>>
    %c2_i32_16 = arith.constant 2 : i32
    %c0_i32_17 = arith.constant 0 : i32
    %24 = tpu.memref_slice %arg5[%c0_i32_13, %c2_i32_16, %c0_i32_17] : memref<1x8x128xf32, #tpu.memory_space<vmem>> -> memref<1x1x128xf32, #tpu.memory_space<vmem>>
    %25 = tpu.memref_squeeze %24 : memref<1x1x128xf32, #tpu.memory_space<vmem>> -> memref<1x128xf32, #tpu.memory_space<vmem>>
    %26 = tpu.memref_slice %arg6[%c0_i32_14] : memref<1x!tpu.dma_semaphore, #tpu.memory_space<semaphore_mem>> -> memref<1x!tpu.dma_semaphore, #tpu.memory_space<semaphore_mem>>
    %27 = tpu.memref_squeeze %26 : memref<1x!tpu.dma_semaphore, #tpu.memory_space<semaphore_mem>> -> memref<!tpu.dma_semaphore, #tpu.memory_space<semaphore_mem>>
    tpu.enqueue_dma source(%23 : memref<1x128xf32, #tpu.memory_space<any>>) target(%25 : memref<1x128xf32, #tpu.memory_space<vmem>>) target_semaphore(%27 : memref<!tpu.dma_semaphore, #tpu.memory_space<semaphore_mem>>)
    %c0_i32_18 = arith.constant 0 : i32
    %28 = arith.addi %0, %c0_i32_18 : i32
    %c3_i32 = arith.constant 3 : i32
    %29 = arith.addi %28, %c3_i32 : i32
    %30 = arith.index_cast %29 : i32 to index
    %31 = memref.load %arg1[%30] : memref<16xi32, #tpu.memory_space<smem>>
    %c0_i32_19 = arith.constant 0 : i32
    %c0_i32_20 = arith.constant 0 : i32
    %c0_i32_21 = arith.constant 0 : i32
    %32 = tpu.memref_slice %arg2[%31, %c0_i32_21] : memref<64x128xf32, #tpu.memory_space<any>> -> memref<1x128xf32, #tpu.memory_space<any>>
    %c3_i32_22 = arith.constant 3 : i32
    %c0_i32_23 = arith.constant 0 : i32
    %33 = tpu.memref_slice %arg5[%c0_i32_19, %c3_i32_22, %c0_i32_23] : memref<1x8x128xf32, #tpu.memory_space<vmem>> -> memref<1x1x128xf32, #tpu.memory_space<vmem>>
    %34 = tpu.memref_squeeze %33 : memref<1x1x128xf32, #tpu.memory_space<vmem>> -> memref<1x128xf32, #tpu.memory_space<vmem>>
    %35 = tpu.memref_slice %arg6[%c0_i32_20] : memref<1x!tpu.dma_semaphore, #tpu.memory_space<semaphore_mem>> -> memref<1x!tpu.dma_semaphore, #tpu.memory_space<semaphore_mem>>
    %36 = tpu.memref_squeeze %35 : memref<1x!tpu.dma_semaphore, #tpu.memory_space<semaphore_mem>> -> memref<!tpu.dma_semaphore, #tpu.memory_space<semaphore_mem>>
    tpu.enqueue_dma source(%32 : memref<1x128xf32, #tpu.memory_space<any>>) target(%34 : memref<1x128xf32, #tpu.memory_space<vmem>>) target_semaphore(%36 : memref<!tpu.dma_semaphore, #tpu.memory_space<semaphore_mem>>)
    %c0_i32_24 = arith.constant 0 : i32
    %37 = arith.addi %0, %c0_i32_24 : i32
    %c4_i32 = arith.constant 4 : i32
    %38 = arith.addi %37, %c4_i32 : i32
    %39 = arith.index_cast %38 : i32 to index
    %40 = memref.load %arg1[%39] : memref<16xi32, #tpu.memory_space<smem>>
    %c0_i32_25 = arith.constant 0 : i32
    %c0_i32_26 = arith.constant 0 : i32
    %c0_i32_27 = arith.constant 0 : i32
    %41 = tpu.memref_slice %arg2[%40, %c0_i32_27] : memref<64x128xf32, #tpu.memory_space<any>> -> memref<1x128xf32, #tpu.memory_space<any>>
    %c4_i32_28 = arith.constant 4 : i32
    %c0_i32_29 = arith.constant 0 : i32
    %42 = tpu.memref_slice %arg5[%c0_i32_25, %c4_i32_28, %c0_i32_29] : memref<1x8x128xf32, #tpu.memory_space<vmem>> -> memref<1x1x128xf32, #tpu.memory_space<vmem>>
    %43 = tpu.memref_squeeze %42 : memref<1x1x128xf32, #tpu.memory_space<vmem>> -> memref<1x128xf32, #tpu.memory_space<vmem>>
    %44 = tpu.memref_slice %arg6[%c0_i32_26] : memref<1x!tpu.dma_semaphore, #tpu.memory_space<semaphore_mem>> -> memref<1x!tpu.dma_semaphore, #tpu.memory_space<semaphore_mem>>
    %45 = tpu.memref_squeeze %44 : memref<1x!tpu.dma_semaphore, #tpu.memory_space<semaphore_mem>> -> memref<!tpu.dma_semaphore, #tpu.memory_space<semaphore_mem>>
    tpu.enqueue_dma source(%41 : memref<1x128xf32, #tpu.memory_space<any>>) target(%43 : memref<1x128xf32, #tpu.memory_space<vmem>>) target_semaphore(%45 : memref<!tpu.dma_semaphore, #tpu.memory_space<semaphore_mem>>)
    %c0_i32_30 = arith.constant 0 : i32
    %46 = arith.addi %0, %c0_i32_30 : i32
    %c5_i32 = arith.constant 5 : i32
    %47 = arith.addi %46, %c5_i32 : i32
    %48 = arith.index_cast %47 : i32 to index
    %49 = memref.load %arg1[%48] : memref<16xi32, #tpu.memory_space<smem>>
    %c0_i32_31 = arith.constant 0 : i32
    %c0_i32_32 = arith.constant 0 : i32
    %c0_i32_33 = arith.constant 0 : i32
    %50 = tpu.memref_slice %arg2[%49, %c0_i32_33] : memref<64x128xf32, #tpu.memory_space<any>> -> memref<1x128xf32, #tpu.memory_space<any>>
    %c5_i32_34 = arith.constant 5 : i32
    %c0_i32_35 = arith.constant 0 : i32
    %51 = tpu.memref_slice %arg5[%c0_i32_31, %c5_i32_34, %c0_i32_35] : memref<1x8x128xf32, #tpu.memory_space<vmem>> -> memref<1x1x128xf32, #tpu.memory_space<vmem>>
    %52 = tpu.memref_squeeze %51 : memref<1x1x128xf32, #tpu.memory_space<vmem>> -> memref<1x128xf32, #tpu.memory_space<vmem>>
    %53 = tpu.memref_slice %arg6[%c0_i32_32] : memref<1x!tpu.dma_semaphore, #tpu.memory_space<semaphore_mem>> -> memref<1x!tpu.dma_semaphore, #tpu.memory_space<semaphore_mem>>
    %54 = tpu.memref_squeeze %53 : memref<1x!tpu.dma_semaphore, #tpu.memory_space<semaphore_mem>> -> memref<!tpu.dma_semaphore, #tpu.memory_space<semaphore_mem>>
    tpu.enqueue_dma source(%50 : memref<1x128xf32, #tpu.memory_space<any>>) target(%52 : memref<1x128xf32, #tpu.memory_space<vmem>>) target_semaphore(%54 : memref<!tpu.dma_semaphore, #tpu.memory_space<semaphore_mem>>)
    %c0_i32_36 = arith.constant 0 : i32
    %55 = arith.addi %0, %c0_i32_36 : i32
    %c6_i32 = arith.constant 6 : i32
    %56 = arith.addi %55, %c6_i32 : i32
    %57 = arith.index_cast %56 : i32 to index
    %58 = memref.load %arg1[%57] : memref<16xi32, #tpu.memory_space<smem>>
    %c0_i32_37 = arith.constant 0 : i32
    %c0_i32_38 = arith.constant 0 : i32
    %c0_i32_39 = arith.constant 0 : i32
    %59 = tpu.memref_slice %arg2[%58, %c0_i32_39] : memref<64x128xf32, #tpu.memory_space<any>> -> memref<1x128xf32, #tpu.memory_space<any>>
    %c6_i32_40 = arith.constant 6 : i32
    %c0_i32_41 = arith.constant 0 : i32
    %60 = tpu.memref_slice %arg5[%c0_i32_37, %c6_i32_40, %c0_i32_41] : memref<1x8x128xf32, #tpu.memory_space<vmem>> -> memref<1x1x128xf32, #tpu.memory_space<vmem>>
    %61 = tpu.memref_squeeze %60 : memref<1x1x128xf32, #tpu.memory_space<vmem>> -> memref<1x128xf32, #tpu.memory_space<vmem>>
    %62 = tpu.memref_slice %arg6[%c0_i32_38] : memref<1x!tpu.dma_semaphore, #tpu.memory_space<semaphore_mem>> -> memref<1x!tpu.dma_semaphore, #tpu.memory_space<semaphore_mem>>
    %63 = tpu.memref_squeeze %62 : memref<1x!tpu.dma_semaphore, #tpu.memory_space<semaphore_mem>> -> memref<!tpu.dma_semaphore, #tpu.memory_space<semaphore_mem>>
    tpu.enqueue_dma source(%59 : memref<1x128xf32, #tpu.memory_space<any>>) target(%61 : memref<1x128xf32, #tpu.memory_space<vmem>>) target_semaphore(%63 : memref<!tpu.dma_semaphore, #tpu.memory_space<semaphore_mem>>)
    %c0_i32_42 = arith.constant 0 : i32
    %64 = arith.addi %0, %c0_i32_42 : i32
    %c7_i32 = arith.constant 7 : i32
    %65 = arith.addi %64, %c7_i32 : i32
    %66 = arith.index_cast %65 : i32 to index
    %67 = memref.load %arg1[%66] : memref<16xi32, #tpu.memory_space<smem>>
    %c0_i32_43 = arith.constant 0 : i32
    %c0_i32_44 = arith.constant 0 : i32
    %c0_i32_45 = arith.constant 0 : i32
    %68 = tpu.memref_slice %arg2[%67, %c0_i32_45] : memref<64x128xf32, #tpu.memory_space<any>> -> memref<1x128xf32, #tpu.memory_space<any>>
    %c7_i32_46 = arith.constant 7 : i32
    %c0_i32_47 = arith.constant 0 : i32
    %69 = tpu.memref_slice %arg5[%c0_i32_43, %c7_i32_46, %c0_i32_47] : memref<1x8x128xf32, #tpu.memory_space<vmem>> -> memref<1x1x128xf32, #tpu.memory_space<vmem>>
    %70 = tpu.memref_squeeze %69 : memref<1x1x128xf32, #tpu.memory_space<vmem>> -> memref<1x128xf32, #tpu.memory_space<vmem>>
    %71 = tpu.memref_slice %arg6[%c0_i32_44] : memref<1x!tpu.dma_semaphore, #tpu.memory_space<semaphore_mem>> -> memref<1x!tpu.dma_semaphore, #tpu.memory_space<semaphore_mem>>
    %72 = tpu.memref_squeeze %71 : memref<1x!tpu.dma_semaphore, #tpu.memory_space<semaphore_mem>> -> memref<!tpu.dma_semaphore, #tpu.memory_space<semaphore_mem>>
    tpu.enqueue_dma source(%68 : memref<1x128xf32, #tpu.memory_space<any>>) target(%70 : memref<1x128xf32, #tpu.memory_space<vmem>>) target_semaphore(%72 : memref<!tpu.dma_semaphore, #tpu.memory_space<semaphore_mem>>)
    %c0_i32_48 = arith.constant 0 : i32
    %c0_i32_49 = arith.constant 0 : i32
    %c0_i32_50 = arith.constant 0 : i32
    %c0_i32_51 = arith.constant 0 : i32
    %73 = tpu.memref_slice %arg2[%c0_i32_50, %c0_i32_51] : memref<64x128xf32, #tpu.memory_space<any>> -> memref<1x128xf32, #tpu.memory_space<any>>
    %c0_i32_52 = arith.constant 0 : i32
    %c0_i32_53 = arith.constant 0 : i32
    %74 = tpu.memref_slice %arg5[%c0_i32_48, %c0_i32_52, %c0_i32_53] : memref<1x8x128xf32, #tpu.memory_space<vmem>> -> memref<1x1x128xf32, #tpu.memory_space<vmem>>
    %75 = tpu.memref_squeeze %74 : memref<1x1x128xf32, #tpu.memory_space<vmem>> -> memref<1x128xf32, #tpu.memory_space<vmem>>
    %76 = tpu.memref_slice %arg6[%c0_i32_49] : memref<1x!tpu.dma_semaphore, #tpu.memory_space<semaphore_mem>> -> memref<1x!tpu.dma_semaphore, #tpu.memory_space<semaphore_mem>>
    %77 = tpu.memref_squeeze %76 : memref<1x!tpu.dma_semaphore, #tpu.memory_space<semaphore_mem>> -> memref<!tpu.dma_semaphore, #tpu.memory_space<semaphore_mem>>
    tpu.wait_dma2 semaphore(%77 : memref<!tpu.dma_semaphore, #tpu.memory_space<semaphore_mem>>) src(%73 : memref<1x128xf32, #tpu.memory_space<any>>) dst(%75 : memref<1x128xf32, #tpu.memory_space<vmem>>)
    %c0_i32_54 = arith.constant 0 : i32
    %c0_i32_55 = arith.constant 0 : i32
    %c0_i32_56 = arith.constant 0 : i32
    %c0_i32_57 = arith.constant 0 : i32
    %78 = tpu.memref_slice %arg2[%c0_i32_56, %c0_i32_57] : memref<64x128xf32, #tpu.memory_space<any>> -> memref<1x128xf32, #tpu.memory_space<any>>
    %c1_i32_58 = arith.constant 1 : i32
    %c0_i32_59 = arith.constant 0 : i32
    %79 = tpu.memref_slice %arg5[%c0_i32_54, %c1_i32_58, %c0_i32_59] : memref<1x8x128xf32, #tpu.memory_space<vmem>> -> memref<1x1x128xf32, #tpu.memory_space<vmem>>
    %80 = tpu.memref_squeeze %79 : memref<1x1x128xf32, #tpu.memory_space<vmem>> -> memref<1x128xf32, #tpu.memory_space<vmem>>
    %81 = tpu.memref_slice %arg6[%c0_i32_55] : memref<1x!tpu.dma_semaphore, #tpu.memory_space<semaphore_mem>> -> memref<1x!tpu.dma_semaphore, #tpu.memory_space<semaphore_mem>>
    %82 = tpu.memref_squeeze %81 : memref<1x!tpu.dma_semaphore, #tpu.memory_space<semaphore_mem>> -> memref<!tpu.dma_semaphore, #tpu.memory_space<semaphore_mem>>
    tpu.wait_dma2 semaphore(%82 : memref<!tpu.dma_semaphore, #tpu.memory_space<semaphore_mem>>) src(%78 : memref<1x128xf32, #tpu.memory_space<any>>) dst(%80 : memref<1x128xf32, #tpu.memory_space<vmem>>)
    %c0_i32_60 = arith.constant 0 : i32
    %c0_i32_61 = arith.constant 0 : i32
    %c0_i32_62 = arith.constant 0 : i32
    %c0_i32_63 = arith.constant 0 : i32
    %83 = tpu.memref_slice %arg2[%c0_i32_62, %c0_i32_63] : memref<64x128xf32, #tpu.memory_space<any>> -> memref<1x128xf32, #tpu.memory_space<any>>
    %c2_i32_64 = arith.constant 2 : i32
    %c0_i32_65 = arith.constant 0 : i32
    %84 = tpu.memref_slice %arg5[%c0_i32_60, %c2_i32_64, %c0_i32_65] : memref<1x8x128xf32, #tpu.memory_space<vmem>> -> memref<1x1x128xf32, #tpu.memory_space<vmem>>
    %85 = tpu.memref_squeeze %84 : memref<1x1x128xf32, #tpu.memory_space<vmem>> -> memref<1x128xf32, #tpu.memory_space<vmem>>
    %86 = tpu.memref_slice %arg6[%c0_i32_61] : memref<1x!tpu.dma_semaphore, #tpu.memory_space<semaphore_mem>> -> memref<1x!tpu.dma_semaphore, #tpu.memory_space<semaphore_mem>>
    %87 = tpu.memref_squeeze %86 : memref<1x!tpu.dma_semaphore, #tpu.memory_space<semaphore_mem>> -> memref<!tpu.dma_semaphore, #tpu.memory_space<semaphore_mem>>
    tpu.wait_dma2 semaphore(%87 : memref<!tpu.dma_semaphore, #tpu.memory_space<semaphore_mem>>) src(%83 : memref<1x128xf32, #tpu.memory_space<any>>) dst(%85 : memref<1x128xf32, #tpu.memory_space<vmem>>)
    %c0_i32_66 = arith.constant 0 : i32
    %c0_i32_67 = arith.constant 0 : i32
    %c0_i32_68 = arith.constant 0 : i32
    %c0_i32_69 = arith.constant 0 : i32
    %88 = tpu.memref_slice %arg2[%c0_i32_68, %c0_i32_69] : memref<64x128xf32, #tpu.memory_space<any>> -> memref<1x128xf32, #tpu.memory_space<any>>
    %c3_i32_70 = arith.constant 3 : i32
    %c0_i32_71 = arith.constant 0 : i32
    %89 = tpu.memref_slice %arg5[%c0_i32_66, %c3_i32_70, %c0_i32_71] : memref<1x8x128xf32, #tpu.memory_space<vmem>> -> memref<1x1x128xf32, #tpu.memory_space<vmem>>
    %90 = tpu.memref_squeeze %89 : memref<1x1x128xf32, #tpu.memory_space<vmem>> -> memref<1x128xf32, #tpu.memory_space<vmem>>
    %91 = tpu.memref_slice %arg6[%c0_i32_67] : memref<1x!tpu.dma_semaphore, #tpu.memory_space<semaphore_mem>> -> memref<1x!tpu.dma_semaphore, #tpu.memory_space<semaphore_mem>>
    %92 = tpu.memref_squeeze %91 : memref<1x!tpu.dma_semaphore, #tpu.memory_space<semaphore_mem>> -> memref<!tpu.dma_semaphore, #tpu.memory_space<semaphore_mem>>
    tpu.wait_dma2 semaphore(%92 : memref<!tpu.dma_semaphore, #tpu.memory_space<semaphore_mem>>) src(%88 : memref<1x128xf32, #tpu.memory_space<any>>) dst(%90 : memref<1x128xf32, #tpu.memory_space<vmem>>)
    %c0_i32_72 = arith.constant 0 : i32
    %c0_i32_73 = arith.constant 0 : i32
    %c0_i32_74 = arith.constant 0 : i32
    %c0_i32_75 = arith.constant 0 : i32
    %93 = tpu.memref_slice %arg2[%c0_i32_74, %c0_i32_75] : memref<64x128xf32, #tpu.memory_space<any>> -> memref<1x128xf32, #tpu.memory_space<any>>
    %c4_i32_76 = arith.constant 4 : i32
    %c0_i32_77 = arith.constant 0 : i32
    %94 = tpu.memref_slice %arg5[%c0_i32_72, %c4_i32_76, %c0_i32_77] : memref<1x8x128xf32, #tpu.memory_space<vmem>> -> memref<1x1x128xf32, #tpu.memory_space<vmem>>
    %95 = tpu.memref_squeeze %94 : memref<1x1x128xf32, #tpu.memory_space<vmem>> -> memref<1x128xf32, #tpu.memory_space<vmem>>
    %96 = tpu.memref_slice %arg6[%c0_i32_73] : memref<1x!tpu.dma_semaphore, #tpu.memory_space<semaphore_mem>> -> memref<1x!tpu.dma_semaphore, #tpu.memory_space<semaphore_mem>>
    %97 = tpu.memref_squeeze %96 : memref<1x!tpu.dma_semaphore, #tpu.memory_space<semaphore_mem>> -> memref<!tpu.dma_semaphore, #tpu.memory_space<semaphore_mem>>
    tpu.wait_dma2 semaphore(%97 : memref<!tpu.dma_semaphore, #tpu.memory_space<semaphore_mem>>) src(%93 : memref<1x128xf32, #tpu.memory_space<any>>) dst(%95 : memref<1x128xf32, #tpu.memory_space<vmem>>)
    %c0_i32_78 = arith.constant 0 : i32
    %c0_i32_79 = arith.constant 0 : i32
    %c0_i32_80 = arith.constant 0 : i32
    %c0_i32_81 = arith.constant 0 : i32
    %98 = tpu.memref_slice %arg2[%c0_i32_80, %c0_i32_81] : memref<64x128xf32, #tpu.memory_space<any>> -> memref<1x128xf32, #tpu.memory_space<any>>
    %c5_i32_82 = arith.constant 5 : i32
    %c0_i32_83 = arith.constant 0 : i32
    %99 = tpu.memref_slice %arg5[%c0_i32_78, %c5_i32_82, %c0_i32_83] : memref<1x8x128xf32, #tpu.memory_space<vmem>> -> memref<1x1x128xf32, #tpu.memory_space<vmem>>
    %100 = tpu.memref_squeeze %99 : memref<1x1x128xf32, #tpu.memory_space<vmem>> -> memref<1x128xf32, #tpu.memory_space<vmem>>
    %101 = tpu.memref_slice %arg6[%c0_i32_79] : memref<1x!tpu.dma_semaphore, #tpu.memory_space<semaphore_mem>> -> memref<1x!tpu.dma_semaphore, #tpu.memory_space<semaphore_mem>>
    %102 = tpu.memref_squeeze %101 : memref<1x!tpu.dma_semaphore, #tpu.memory_space<semaphore_mem>> -> memref<!tpu.dma_semaphore, #tpu.memory_space<semaphore_mem>>
    tpu.wait_dma2 semaphore(%102 : memref<!tpu.dma_semaphore, #tpu.memory_space<semaphore_mem>>) src(%98 : memref<1x128xf32, #tpu.memory_space<any>>) dst(%100 : memref<1x128xf32, #tpu.memory_space<vmem>>)
    %c0_i32_84 = arith.constant 0 : i32
    %c0_i32_85 = arith.constant 0 : i32
    %c0_i32_86 = arith.constant 0 : i32
    %c0_i32_87 = arith.constant 0 : i32
    %103 = tpu.memref_slice %arg2[%c0_i32_86, %c0_i32_87] : memref<64x128xf32, #tpu.memory_space<any>> -> memref<1x128xf32, #tpu.memory_space<any>>
    %c6_i32_88 = arith.constant 6 : i32
    %c0_i32_89 = arith.constant 0 : i32
    %104 = tpu.memref_slice %arg5[%c0_i32_84, %c6_i32_88, %c0_i32_89] : memref<1x8x128xf32, #tpu.memory_space<vmem>> -> memref<1x1x128xf32, #tpu.memory_space<vmem>>
    %105 = tpu.memref_squeeze %104 : memref<1x1x128xf32, #tpu.memory_space<vmem>> -> memref<1x128xf32, #tpu.memory_space<vmem>>
    %106 = tpu.memref_slice %arg6[%c0_i32_85] : memref<1x!tpu.dma_semaphore, #tpu.memory_space<semaphore_mem>> -> memref<1x!tpu.dma_semaphore, #tpu.memory_space<semaphore_mem>>
    %107 = tpu.memref_squeeze %106 : memref<1x!tpu.dma_semaphore, #tpu.memory_space<semaphore_mem>> -> memref<!tpu.dma_semaphore, #tpu.memory_space<semaphore_mem>>
    tpu.wait_dma2 semaphore(%107 : memref<!tpu.dma_semaphore, #tpu.memory_space<semaphore_mem>>) src(%103 : memref<1x128xf32, #tpu.memory_space<any>>) dst(%105 : memref<1x128xf32, #tpu.memory_space<vmem>>)
    %c0_i32_90 = arith.constant 0 : i32
    %c0_i32_91 = arith.constant 0 : i32
    %c0_i32_92 = arith.constant 0 : i32
    %c0_i32_93 = arith.constant 0 : i32
    %108 = tpu.memref_slice %arg2[%c0_i32_92, %c0_i32_93] : memref<64x128xf32, #tpu.memory_space<any>> -> memref<1x128xf32, #tpu.memory_space<any>>
    %c7_i32_94 = arith.constant 7 : i32
    %c0_i32_95 = arith.constant 0 : i32
    %109 = tpu.memref_slice %arg5[%c0_i32_90, %c7_i32_94, %c0_i32_95] : memref<1x8x128xf32, #tpu.memory_space<vmem>> -> memref<1x1x128xf32, #tpu.memory_space<vmem>>
    %110 = tpu.memref_squeeze %109 : memref<1x1x128xf32, #tpu.memory_space<vmem>> -> memref<1x128xf32, #tpu.memory_space<vmem>>
    %111 = tpu.memref_slice %arg6[%c0_i32_91] : memref<1x!tpu.dma_semaphore, #tpu.memory_space<semaphore_mem>> -> memref<1x!tpu.dma_semaphore, #tpu.memory_space<semaphore_mem>>
    %112 = tpu.memref_squeeze %111 : memref<1x!tpu.dma_semaphore, #tpu.memory_space<semaphore_mem>> -> memref<!tpu.dma_semaphore, #tpu.memory_space<semaphore_mem>>
    tpu.wait_dma2 semaphore(%112 : memref<!tpu.dma_semaphore, #tpu.memory_space<semaphore_mem>>) src(%108 : memref<1x128xf32, #tpu.memory_space<any>>) dst(%110 : memref<1x128xf32, #tpu.memory_space<vmem>>)
    %c0 = arith.constant 0 : index
    %c0_96 = arith.constant 0 : index
    %c0_97 = arith.constant 0 : index
    %113 = vector.load %arg5[%c0, %c0_96, %c0_97] : memref<1x8x128xf32, #tpu.memory_space<vmem>>, vector<1x8x128xf32>
    %114 = vector.shape_cast %113 : vector<1x8x128xf32> to vector<8x128xf32>
    %c0_98 = arith.constant 0 : index
    %c0_99 = arith.constant 0 : index
    %115 = vector.load %arg3[%c0_98, %c0_99] : memref<8x128xf32, #tpu.memory_space<vmem>>, vector<8x128xf32>
    %116 = arith.addf %114, %115 : vector<8x128xf32>
    %c0_100 = arith.constant 0 : index
    %c0_101 = arith.constant 0 : index
    %c0_102 = arith.constant 0 : index
    %117 = vector.load %arg4[%c0_100, %c0_101, %c0_102] : memref<1x8x128xf32, #tpu.memory_space<vmem>>, vector<1x8x128xf32>
    %118 = vector.shape_cast %117 : vector<1x8x128xf32> to vector<8x128xf32>
    %119 = vector.shape_cast %116 : vector<8x128xf32> to vector<1x8x128xf32>
    tpu.vector_store %arg4[%c0_100, %c0_101, %c0_102], %119 {strides = array<i32>} : memref<1x8x128xf32, #tpu.memory_space<vmem>>, vector<1x8x128xf32>,
    return
  }
  func.func @transform_1(%arg0: i32, %arg1: memref<16xi32, #tpu.memory_space<smem>>) -> (i32, i32) {
    %c0_i32 = arith.constant 0 : i32
    %c0_i32_0 = arith.constant 0 : i32
    %c0_i32_1 = arith.constant 0 : i32
    return %c0_i32, %c0_i32_0 : i32, i32
  }
  func.func @transform_2(%arg0: i32, %arg1: memref<16xi32, #tpu.memory_space<smem>>) -> (i32, i32, i32) {
    %c0_i32 = arith.constant 0 : i32
    %c0_i32_0 = arith.constant 0 : i32
    %c0_i32_1 = arith.constant 0 : i32
    return %arg0, %c0_i32, %c0_i32_0 : i32, i32, i32
  }
}

</mosaic_0001>

<llo_original>
// kernel: tpu_custom_call.1
$region0: #{tpu_custom_call.1}
  #allocation0 [shape = 'u32[]', space=smem, size = 0x4, offset = 0x4, fixed_abs, tag = 'smem constant byte address 0x4 - core index']
  #allocation1 [shape = 'u32[72,128]{1,0:T(1,128)}', space=vmem, size = 0x9000, scoped, tag = 'internal scratch']
  #allocation2 [shape = 'f32[1,8,128]{2,1,0:T(8,128)}', space=vmem, size = 0x1000, scoped, tag = 'scratch operand']
  #allocation3 [shape = 's32[1]{0}', space=sflag, size = 0x4, scoped, tag = 'scratch operand']
  #allocation4 [shape = 's32[1]{0}', space=sflag, size = 0x4, scoped, tag = 'scoped memory for tpu_custom_call.1']
  #allocation5 [shape = 'u8[512]{0}', space=smem, size = 0x200, scoped, tag = 'prefetched SMEM operand 0']
  #allocation10 [shape = 's32[]', space=sflag, size = 0x4, offset = 0, fixed_abs, tag = 'sflag constant byte address 0x0 - dummy sync flag']
  #allocation11 [shape = 's32[]', space=sflag, size = 0x4, offset = 0, fixed_abs, tag = 'sflag constant byte address 0x0 - dummy sync flag']
  #allocation12 [shape = 'u32[]', space=smem, size = 0x4, offset = 0x44, fixed_abs, tag = 'smem constant byte address 0x44 - assertion arg 0']
  #allocation13 [shape = 'u32[]', space=smem, size = 0x4, offset = 0x48, fixed_abs, tag = 'smem constant byte address 0x48 - assertion arg 1']
  #allocation14 [shape = 's32[]', space=sflag, size = 0x4, offset = 0, fixed_abs, tag = 'sflag constant byte address 0x0 - dummy sync flag']
  #allocation15 [shape = 's32[]', space=sflag, size = 0x4, offset = 0, fixed_abs, tag = 'sflag constant byte address 0x0 - dummy sync flag']
  #allocation16 [shape = 's32[]', space=sflag, size = 0x4, offset = 0, fixed_abs, tag = 'sflag constant byte address 0x0 - dummy sync flag']
  #allocation17 [shape = 's32[]', space=sflag, size = 0x4, offset = 0, fixed_abs, tag = 'sflag constant byte address 0x0 - dummy sync flag']
  #allocation18 [shape = 's32[]', space=sflag, size = 0x4, offset = 0, fixed_abs, tag = 'sflag constant byte address 0x0 - dummy sync flag']
  #allocation19 [shape = 's32[]', space=sflag, size = 0x4, offset = 0, fixed_abs, tag = 'sflag constant byte address 0x0 - dummy sync flag']
  #allocation20 [shape = 's32[]', space=sflag, size = 0x4, offset = 0, fixed_abs, tag = 'sflag constant byte address 0x0 - dummy sync flag']
  #allocation21 [shape = 's32[]', space=sflag, size = 0x4, offset = 0, fixed_abs, tag = 'sflag constant byte address 0x0 - dummy sync flag']
  #allocation22 [shape = 's32[]', space=sflag, size = 0x4, offset = 0, fixed_abs, tag = 'sflag constant byte address 0x0 - dummy sync flag']
  #allocation23 [shape = 's32[]', space=sflag, size = 0x4, offset = 0, fixed_abs, tag = 'sflag constant byte address 0x0 - dummy sync flag']
  #allocation24 [shape = 's32[]', space=sflag, size = 0x4, offset = 0, fixed_abs, tag = 'sflag constant byte address 0x0 - dummy sync flag']
  #allocation25 [shape = 's32[]', space=sflag, size = 0x4, offset = 0, fixed_abs, tag = 'sflag constant byte address 0x0 - dummy sync flag']
  #allocation26 [shape = 's32[]', space=sflag, size = 0x4, offset = 0, fixed_abs, tag = 'sflag constant byte address 0x0 - dummy sync flag']
  #allocation27 [shape = 's32[]', space=sflag, size = 0x4, offset = 0, fixed_abs, tag = 'sflag constant byte address 0x0 - dummy sync flag']
  %s0 = inlined_call_operand.hbm [shape: s32[16], index: 0, kind: input, shape index: {}]
  %s1 = inlined_call_operand.hbm [shape: f32[64,128], index: 1, kind: input, shape index: {}]
  %s2 = inlined_call_operand.hbm [shape: f32[8,128], index: 2, kind: input, shape index: {}]
  %s3 = inlined_call_operand.hbm [shape: f32[2,8,128], index: 3, kind: output, shape index: {}]
  %s4 = sld [smem:[#allocation0]]
  $region73: #{tpu_custom_call.1} parent=0
    _
  %s6 = ssub.s32 1, %s4
  %s7 = scalar_select 0, %s6, %s4
  %s9 = sshll.u32 %s0, 4
  %s10 = int_to_ptr.hbm [resolvable:$true] %s9
  %12 = dma.hbm_to_smem %s10, 16, [#allocation5], [#allocation4]
  %14 = dma.done [#allocation4], 16
  %15 = sfence
  $region1: #{tpu_custom_call.1} parent=0
    #allocation6 [shape = 'u8[4096]{0}', space=vmem, size = 0x1000, scoped, tag = 'input window, operand 2, single buffered']
    #allocation7 [shape = 's32[2]{0}', space=sflag, size = 0x8, scoped, tag = 'scoped memory for tpu_custom_call.1']
    #allocation8 [shape = 's32[2]{0}', space=sflag, size = 0x8, scoped, tag = 'scoped memory for tpu_custom_call.1']
    #allocation9 [shape = 'u8[8192]{0}', space=vmem, size = 0x2000, scoped, tag = 'output window, operand 0']
    %16 = vsyncpa [#allocation7], 0
    %17 = vsyncpa [#allocation8], 0
    %s18 = scalar_lea.sflag [#allocation8], 1
    %19 = vsyncpa %s18, 0
    loop: start=0, step=1, limit=4
    $region2: #{tpu_custom_call.1} parent=1 // loop_pre_header
      _
    $region3: #{tpu_custom_call.1} parent=1 // loop_header
      %s21 = sphi 0, %s25
      %p22 = scmp.ge.s32.totalorder %s21, 4
      %s29 = sphi 0, %s29
      %s31 = sphi 0, %s29
      %s32 = sphi 0, %s31
      %s46 = sphi 0, %s32
      %s52 = sphi 0, %s54
      %s55 = sphi 0, %s52
      %s56 = sphi 0, %s55
      %s72 = sphi 0, %s56
    $region4: #{tpu_custom_call.1} parent=1 // loop_header_branch
      %24 = sbr.rel (%p22) target = $region8
    $region5: #{tpu_custom_call.1} parent=1 // loop_body
      %s26 = ssub.s32 %s21, 1
      %s27 = ssub.s32 %s21, 2
      %s28 = sadd.s32 %s21, 1
      %s30 = sadd.s32 %s29, 1
      %p33 = scmp.eq.s32.totalorder %s21, 1
      %p34 = scmp.ne.s32.totalorder %s29, %s31
      %p35 = scmp.eq.s32.totalorder %s21, 0
      %p36 = por %p34, %p35
      %p37 = scmp.ne.s32.totalorder %s29, %s31
      %p38 = scmp.eq.s32.totalorder %s26, 1
      %p39 = por %p37, %p38
      %p40 = scmp.ne.s32.totalorder %s31, %s32
      %p41 = scmp.eq.s32.totalorder %s26, 0
      %p42 = por %p40, %p41
      %p43 = scmp.ne.s32.totalorder %s31, %s32
      %p44 = scmp.eq.s32.totalorder %s27, 1
      %p45 = por %p43, %p44
      %p47 = scmp.ne.s32.totalorder %s32, %s46
      %p48 = scmp.eq.s32.totalorder %s27, 0
      %p49 = por %p47, %p48
      %s50 = ssub.s32 %s21, %s28
      %p51 = scmp.eq.s32.totalorder %s50, 0
      %s53 = sadd.s32 %s52, 1
      %s54 = scalar_select %p51, %s52, %s53
      %p57 = pneg %p51
      %p58 = scmp.eq.s32.totalorder %s21, 1
      %p59 = por %p57, %p58
      %p60 = scmp.ne.s32.totalorder %s52, %s55
      %p61 = scmp.eq.s32.totalorder %s21, 0
      %p62 = por %p60, %p61
      %p63 = scmp.ne.s32.totalorder %s52, %s55
      %p64 = scmp.eq.s32.totalorder %s26, 1
      %p65 = por %p63, %p64
      %p66 = scmp.ne.s32.totalorder %s55, %s56
      %p67 = scmp.eq.s32.totalorder %s26, 0
      %p68 = por %p66, %p67
      %p69 = scmp.ne.s32.totalorder %s55, %s56
      %p70 = scmp.eq.s32.totalorder %s27, 1
      %p71 = por %p69, %p70
      %p73 = scmp.ne.s32.totalorder %s56, %s72
      %p74 = scmp.eq.s32.totalorder %s27, 0
      %p75 = por %p73, %p74
      %p76 = scmp.le.s32.totalorder 1, %s21
      %p77 = scmp.lt.s32.totalorder %s21, 3
      %p78 = pnand %p76, %p77
      %p79 = pneg %p78
      // Predicated region
      $region9: #{tpu_custom_call.1} parent=5 // pred_check
        _
      $region10: #{tpu_custom_call.1} parent=5 // pred_check_branch
        %81 = sbr.rel (%p78) target = $region12
      $region11: #{tpu_custom_call.1} parent=5 // pred_region
        %s82 = ssub.s32 %s21, 1
        // Predicated region
        $region13: #{tpu_custom_call.1} parent=11 // pred_check
          %p83 = pneg %p42
        $region14: #{tpu_custom_call.1} parent=11 // pred_check_branch
          %85 = sbr.rel (%p83) target = $region16
        $region15: #{tpu_custom_call.1} parent=11 // pred_region
          %87 = vsyncadd [#allocation7], 0
          %s89 = sshll.u32 %s2, 4
          %s90 = int_to_ptr.hbm [resolvable:$true] %s89
          %s91 = sshll.u32 [#allocation6], 4
          %s92 = int_to_ptr.vmem [resolvable:$true] %s91
          %94 = dma.hbm_to_vmem [thread:$0]  %s90, 128, %s92, [#allocation7]
        $region16: #{tpu_custom_call.1} parent=11 // pred_fallthru
          _
      $region12: #{tpu_custom_call.1} parent=5 // pred_fallthru
        _
      %p95 = scmp.lt.s32.totalorder %s21, 2
      // Predicated region
      $region17: #{tpu_custom_call.1} parent=5 // pred_check
        %p96 = pneg %p95
      $region18: #{tpu_custom_call.1} parent=5 // pred_check_branch
        %98 = sbr.rel (%p96) target = $region20
      $region19: #{tpu_custom_call.1} parent=5 // pred_region
        _
      $region20: #{tpu_custom_call.1} parent=5 // pred_fallthru
        _
      %p99 = scmp.le.s32.totalorder 1, %s21
      %p100 = scmp.lt.s32.totalorder %s21, 3
      %p101 = pnand %p99, %p100
      %p102 = pneg %p101
      // Predicated region
      $region21: #{tpu_custom_call.1} parent=5 // pred_check
        _
      $region22: #{tpu_custom_call.1} parent=5 // pred_check_branch
        %104 = sbr.rel (%p101) target = $region24
      $region23: #{tpu_custom_call.1} parent=5 // pred_region
        %s105 = ssub.s32 %s21, 1
        // Predicated region
        $region25: #{tpu_custom_call.1} parent=23 // pred_check
          %p106 = pneg %p42
        $region26: #{tpu_custom_call.1} parent=23 // pred_check_branch
          %108 = sbr.rel (%p106) target = $region28
        $region27: #{tpu_custom_call.1} parent=23 // pred_region
          %110 = dma.done [#allocation7], 128
        $region28: #{tpu_custom_call.1} parent=23 // pred_fallthru
          _
        %p111 = pneg %p42
        %p112 = pneg %p39
        %p113 = pneg %p68
        %p114 = pneg %p65
        %s115 = sand.u32 %s55, 1
        %s116 = scalar_lea.sflag [#allocation8], %s115
        %s117 = sand.u32 %s55, 1
        %s118 = smul.addr %s117, 8
        %s119 = scalar_lea.vmem [#allocation9], %s118
        %s120 = smul.u32 %s26, 8
        %s121 = sld [smem:[#allocation5 + %s120]]
        %s122 = scalar_lea.hbm %s1, %s121
        // Predicated region
        $region29: #{tpu_custom_call.1} parent=23 // pred_check
          _
        $region30: #{tpu_custom_call.1} parent=23 // pred_check_branch
          %124 = sbr.rel target = $region32
        $region31: #{tpu_custom_call.1} parent=23 // pred_region
          %125 = sst [smem:[#allocation12]] [#allocation11]
          %126 = sst [smem:[#allocation13]] [#allocation10]
        $region32: #{tpu_custom_call.1} parent=23 // pred_fallthru
          _
        %128 = shalt.err (0)
        %s130 = sshll.u32 %s122, 4
        %s131 = int_to_ptr.hbm [resolvable:$true] %s130
        %s132 = sshll.u32 [#allocation2], 4
        %s133 = int_to_ptr.vmem [resolvable:$true] %s132
        %135 = dma.hbm_to_vmem [thread:$0]  %s131, 16, %s133, [#allocation3]
        %s136 = sadd.s32 %s120, 1
        %s137 = sld [smem:[#allocation5 + %s136]]
        %s138 = scalar_lea.hbm %s1, %s137
        %s139 = scalar_lea.vmem [#allocation2], 1
        // Predicated region
        $region33: #{tpu_custom_call.1} parent=23 // pred_check
          _
        $region34: #{tpu_custom_call.1} parent=23 // pred_check_branch
          %141 = sbr.rel target = $region36
        $region35: #{tpu_custom_call.1} parent=23 // pred_region
          %142 = sst [smem:[#allocation12]] [#allocation15]
          %143 = sst [smem:[#allocation13]] [#allocation14]
        $region36: #{tpu_custom_call.1} parent=23 // pred_fallthru
          _
        %145 = shalt.err (0)
        %s147 = sshll.u32 %s138, 4
        %s148 = int_to_ptr.hbm [resolvable:$true] %s147
        %s149 = sshll.u32 %s139, 4
        %s150 = int_to_ptr.vmem [resolvable:$true] %s149
        %152 = dma.hbm_to_vmem [thread:$0]  %s148, 16, %s150, [#allocation3]
        %s153 = sadd.s32 %s120, 2
        %s154 = sld [smem:[#allocation5 + %s153]]
        %s155 = scalar_lea.hbm %s1, %s154
        %s156 = scalar_lea.vmem [#allocation2], 2
        // Predicated region
        $region37: #{tpu_custom_call.1} parent=23 // pred_check
          _
        $region38: #{tpu_custom_call.1} parent=23 // pred_check_branch
          %158 = sbr.rel target = $region40
        $region39: #{tpu_custom_call.1} parent=23 // pred_region
          %159 = sst [smem:[#allocation12]] [#allocation17]
          %160 = sst [smem:[#allocation13]] [#allocation16]
        $region40: #{tpu_custom_call.1} parent=23 // pred_fallthru
          _
        %162 = shalt.err (0)
        %s164 = sshll.u32 %s155, 4
        %s165 = int_to_ptr.hbm [resolvable:$true] %s164
        %s166 = sshll.u32 %s156, 4
        %s167 = int_to_ptr.vmem [resolvable:$true] %s166
        %169 = dma.hbm_to_vmem [thread:$0]  %s165, 16, %s167, [#allocation3]
        %s170 = sadd.s32 %s120, 3
        %s171 = sld [smem:[#allocation5 + %s170]]
        %s172 = scalar_lea.hbm %s1, %s171
        %s173 = scalar_lea.vmem [#allocation2], 3
        // Predicated region
        $region41: #{tpu_custom_call.1} parent=23 // pred_check
          _
        $region42: #{tpu_custom_call.1} parent=23 // pred_check_branch
          %175 = sbr.rel target = $region44
        $region43: #{tpu_custom_call.1} parent=23 // pred_region
          %176 = sst [smem:[#allocation12]] [#allocation19]
          %177 = sst [smem:[#allocation13]] [#allocation18]
        $region44: #{tpu_custom_call.1} parent=23 // pred_fallthru
          _
        %179 = shalt.err (0)
        %s181 = sshll.u32 %s172, 4
        %s182 = int_to_ptr.hbm [resolvable:$true] %s181
        %s183 = sshll.u32 %s173, 4
        %s184 = int_to_ptr.vmem [resolvable:$true] %s183
        %186 = dma.hbm_to_vmem [thread:$0]  %s182, 16, %s184, [#allocation3]
        %s187 = sadd.s32 %s120, 4
        %s188 = sld [smem:[#allocation5 + %s187]]
        %s189 = scalar_lea.hbm %s1, %s188
        %s190 = scalar_lea.vmem [#allocation2], 4
        // Predicated region
        $region45: #{tpu_custom_call.1} parent=23 // pred_check
          _
        $region46: #{tpu_custom_call.1} parent=23 // pred_check_branch
          %192 = sbr.rel target = $region48
        $region47: #{tpu_custom_call.1} parent=23 // pred_region
          %193 = sst [smem:[#allocation12]] [#allocation21]
          %194 = sst [smem:[#allocation13]] [#allocation20]
        $region48: #{tpu_custom_call.1} parent=23 // pred_fallthru
          _
        %196 = shalt.err (0)
        %s198 = sshll.u32 %s189, 4
        %s199 = int_to_ptr.hbm [resolvable:$true] %s198
        %s200 = sshll.u32 %s190, 4
        %s201 = int_to_ptr.vmem [resolvable:$true] %s200
        %203 = dma.hbm_to_vmem [thread:$0]  %s199, 16, %s201, [#allocation3]
        %s204 = sadd.s32 %s120, 5
        %s205 = sld [smem:[#allocation5 + %s204]]
        %s206 = scalar_lea.hbm %s1, %s205
        %s207 = scalar_lea.vmem [#allocation2], 5
        // Predicated region
        $region49: #{tpu_custom_call.1} parent=23 // pred_check
          _
        $region50: #{tpu_custom_call.1} parent=23 // pred_check_branch
          %209 = sbr.rel target = $region52
        $region51: #{tpu_custom_call.1} parent=23 // pred_region
          %210 = sst [smem:[#allocation12]] [#allocation23]
          %211 = sst [smem:[#allocation13]] [#allocation22]
        $region52: #{tpu_custom_call.1} parent=23 // pred_fallthru
          _
        %213 = shalt.err (0)
        %s215 = sshll.u32 %s206, 4
        %s216 = int_to_ptr.hbm [resolvable:$true] %s215
        %s217 = sshll.u32 %s207, 4
        %s218 = int_to_ptr.vmem [resolvable:$true] %s217
        %220 = dma.hbm_to_vmem [thread:$0]  %s216, 16, %s218, [#allocation3]
        %s221 = sadd.s32 %s120, 6
        %s222 = sld [smem:[#allocation5 + %s221]]
        %s223 = scalar_lea.hbm %s1, %s222
        %s224 = scalar_lea.vmem [#allocation2], 6
        // Predicated region
        $region53: #{tpu_custom_call.1} parent=23 // pred_check
          _
        $region54: #{tpu_custom_call.1} parent=23 // pred_check_branch
          %226 = sbr.rel target = $region56
        $region55: #{tpu_custom_call.1} parent=23 // pred_region
          %227 = sst [smem:[#allocation12]] [#allocation25]
          %228 = sst [smem:[#allocation13]] [#allocation24]
        $region56: #{tpu_custom_call.1} parent=23 // pred_fallthru
          _
        %230 = shalt.err (0)
        %s232 = sshll.u32 %s223, 4
        %s233 = int_to_ptr.hbm [resolvable:$true] %s232
        %s234 = sshll.u32 %s224, 4
        %s235 = int_to_ptr.vmem [resolvable:$true] %s234
        %237 = dma.hbm_to_vmem [thread:$0]  %s233, 16, %s235, [#allocation3]
        %s238 = sadd.s32 %s120, 7
        %s239 = sld [smem:[#allocation5 + %s238]]
        %s240 = scalar_lea.hbm %s1, %s239
        %s241 = scalar_lea.vmem [#allocation2], 7
        // Predicated region
        $region57: #{tpu_custom_call.1} parent=23 // pred_check
          _
        $region58: #{tpu_custom_call.1} parent=23 // pred_check_branch
          %243 = sbr.rel target = $region60
        $region59: #{tpu_custom_call.1} parent=23 // pred_region
          %244 = sst [smem:[#allocation12]] [#allocation27]
          %245 = sst [smem:[#allocation13]] [#allocation26]
        $region60: #{tpu_custom_call.1} parent=23 // pred_fallthru
          _
        %247 = shalt.err (0)
        %s249 = sshll.u32 %s240, 4
        %s250 = int_to_ptr.hbm [resolvable:$true] %s249
        %s251 = sshll.u32 %s241, 4
        %s252 = int_to_ptr.vmem [resolvable:$true] %s251
        %254 = dma.hbm_to_vmem [thread:$0]  %s250, 16, %s252, [#allocation3]
        %s255 = smul.u32 1, 1
        %s256 = sshll.u32 %s255, 4
        %257 = dma.done [#allocation3], %s256
        %s258 = sshll.u32 %s255, 4
        %259 = dma.done [#allocation3], %s258
        %s260 = sshll.u32 %s255, 4
        %261 = dma.done [#allocation3], %s260
        %s262 = sshll.u32 %s255, 4
        %263 = dma.done [#allocation3], %s262
        %s264 = sshll.u32 %s255, 4
        %265 = dma.done [#allocation3], %s264
        %s266 = sshll.u32 %s255, 4
        %267 = dma.done [#allocation3], %s266
        %s268 = sshll.u32 %s255, 4
        %269 = dma.done [#allocation3], %s268
        %s270 = sshll.u32 %s255, 4
        %271 = dma.done [#allocation3], %s270
        %v272 = vld [vmem:[#allocation2] sm:$0xff]
        %v273 = vld [vmem:[#allocation6] sm:$0xff]
        %v274 = vadd.f32 %v272, %v273
        %275 = vst [vmem:[%s119] sm:$0xff] %v274
        %s276 = sand.u32 %s55, 1
        %s277 = scalar_lea.sflag [#allocation8], %s276
        %s278 = sand.u32 %s55, 1
        %s279 = smul.addr %s278, 8
        %s280 = scalar_lea.vmem [#allocation9], %s279
        // Predicated region
        $region61: #{tpu_custom_call.1} parent=23 // pred_check
          %p281 = pneg %p65
        $region62: #{tpu_custom_call.1} parent=23 // pred_check_branch
          %283 = sbr.rel (%p281) target = $region64
        $region63: #{tpu_custom_call.1} parent=23 // pred_region
          %285 = vsyncadd %s277, 0
          %s286 = smul.addr %s26, 8
          %s287 = scalar_lea.hbm %s3, %s286
          %s289 = sshll.u32 %s280, 4
          %s290 = int_to_ptr.vmem [resolvable:$true] %s289
          %s291 = sshll.u32 %s287, 4
          %s292 = int_to_ptr.hbm [resolvable:$true] %s291
          %294 = dma.vmem_to_hbm [thread:$0]  %s290, 128, %s292, %s277
        $region64: #{tpu_custom_call.1} parent=23 // pred_fallthru
          _
      $region24: #{tpu_custom_call.1} parent=5 // pred_fallthru
        _
      %p295 = scmp.le.s32.totalorder 2, %s21
      // Predicated region
      $region65: #{tpu_custom_call.1} parent=5 // pred_check
        %p296 = pneg %p295
      $region66: #{tpu_custom_call.1} parent=5 // pred_check_branch
        %298 = sbr.rel (%p296) target = $region68
      $region67: #{tpu_custom_call.1} parent=5 // pred_region
        %s299 = ssub.s32 %s21, 2
        // Predicated region
        $region69: #{tpu_custom_call.1} parent=67 // pred_check
          %p300 = pneg %p71
        $region70: #{tpu_custom_call.1} parent=67 // pred_check_branch
          %302 = sbr.rel (%p300) target = $region72
        $region71: #{tpu_custom_call.1} parent=67 // pred_region
          %s303 = sand.u32 %s56, 1
          %s304 = scalar_lea.sflag [#allocation8], %s303
          %s305 = sand.u32 %s56, 1
          %s306 = smul.addr %s305, 8
          %s307 = scalar_lea.vmem [#allocation9], %s306
          %309 = dma.done %s304, 128
        $region72: #{tpu_custom_call.1} parent=67 // pred_fallthru
          _
      $region68: #{tpu_custom_call.1} parent=5 // pred_fallthru
        _
    $region6: #{tpu_custom_call.1} parent=1 // loop_footer
      %s25 = sadd.s32 1, %s21
    $region7: #{tpu_custom_call.1} parent=1 // loop_footer_branch
      %20 = sbr.rel target = $region3
    $region8: #{tpu_custom_call.1} parent=1 // loop_exit
      _
    %310 = vsyncpa [#allocation7], 1
    %s311 = scalar_lea.sflag [#allocation7], 1
    %312 = vsyncpa %s311, 1
    %313 = vsyncpa [#allocation8], 1
    %s314 = scalar_lea.sflag [#allocation8], 1
    %315 = vsyncpa %s314, 1
  %316 = vsyncmov [#allocation3]
  %s317 = vpop.sfrf %316
  %p318 = scmp.eq.s32.totalorder %s317, 0
  %p319 = pneg %p318
  %321 = shalt.err (%p319)

</llo_original>
